<compile_context>
chip_gen: v5e
topology: v5e:2x2
jax: 0.10.0
libtpu: 0.0.40
codegen_flags: <defaults>
</compile_context>

<pallas_src>
import functools
import math

import jax
import jax.numpy as jnp
from jax.experimental import pallas as pl
from jax.experimental.pallas import tpu as pltpu

_LANES = 128
_SUBLANES = 8


def _round_up(n, m):
    return ((n + m - 1) // m) * m


def _sublane_multiple(*dtypes):
    """Second-minor block multiple for the narrowest input dtype (f32->8, bf16->16, i8->32)."""
    itemsize = min(jnp.dtype(d).itemsize for d in dtypes)
    return _SUBLANES * max(1, 4 // max(1, itemsize))


def _tpu_defaults():
    """(block_rows, vmem_limit_bytes, num_core_splits) per detected TPU generation."""
    kind = ""
    try:
        kind = jax.devices()[0].device_kind.lower()
    except Exception:
        pass
    if "v7" in kind:
        # 2 TensorCores/chip, 64 MiB physical VMEM per TC: 4 MiB tiles, both cores.
        return 8192, 40 * 1024 * 1024, 2
    if "v6" in kind:
        # 128 MiB VMEM: 4 MiB tiles, raise the scoped limit explicitly.
        return 8192, 48 * 1024 * 1024, 1
    # v5e / unknown: 2 MiB tiles (8 MiB double-buffered) fit the 16 MiB scoped default.
    return 4096, None, 1


def _charbonnier_kernel(x_ref, y_ref, o_ref, acc_ref, *, eps2, rows_rem,
                        nsplits, nblocks_per_split):
    """One grid step: (block_rows, 128) tile -> sqrt((x-y)^2 + eps^2), accumulated
    into an (8, 128) f32 VMEM vector accumulator.  Row-overhang of the last block
    (if any) is masked only on the final step of the last core."""
    c = pl.program_id(0)   # core-split index ("parallel")
    i = pl.program_id(1)   # block index within this core's range ("arbitrary")

    @pl.when(i == 0)
    def _():
        acc_ref[...] = jnp.zeros_like(acc_ref)

    # Native-dtype loads (halves HBM bytes for bf16), upcast on the VPU.
    xv = x_ref[...].astype(jnp.float32)
    yv = y_ref[...].astype(jnp.float32)
    diff = xv - yv
    val = jnp.sqrt(diff * diff + jnp.float32(eps2))

    # reshape(-1, 8, 128) stays within (8,128) tile boundaries -> free; the axis-0
    # sum is pure vreg adds (no per-step cross-lane reduce).
    if rows_rem is None:
        # Fast path: every block is full, no masking anywhere.
        acc_ref[...] += val.reshape(-1, _SUBLANES, _LANES).sum(axis=0)
    else:
        is_last = jnp.logical_and(c == nsplits - 1, i == nblocks_per_split - 1)

        @pl.when(jnp.logical_not(is_last))
        def _():
            acc_ref[...] += val.reshape(-1, _SUBLANES, _LANES).sum(axis=0)

        @pl.when(is_last)
        def _():
            # Local row threshold only (no global element index -> no i32 overflow).
            # Keep jnp.where (not multiply-by-mask): padded rows may hold inf/NaN.
            row = jax.lax.broadcasted_iota(jnp.int32, val.shape, 0)
            masked = jnp.where(row < rows_rem, val, jnp.float32(0.0))
            acc_ref[...] += masked.reshape(-1, _SUBLANES, _LANES).sum(axis=0)

    @pl.when(i == nblocks_per_split - 1)
    def _():
        # Single cross-lane reduce per core; wrapper combines partials and divides.
        o_ref[0, 0] = jnp.sum(acc_ref[...])


def charbonnier_loss(x, y, eps=1e-3, *, block_rows=None, vmem_limit_bytes=None,
                     num_core_splits=None):
    """mean(sqrt((x - y)^2 + eps^2)) over all elements.  Returns a scalar f32."""
    assert x.shape == y.shape, "x and y must have the same shape"
    n_valid = math.prod(x.shape)
    eps2 = float(eps) * float(eps)

    def_rows, def_vmem, def_splits = _tpu_defaults()
    if block_rows is None:
        block_rows = def_rows
    if vmem_limit_bytes is None:
        vmem_limit_bytes = def_vmem
    if num_core_splits is None:
        num_core_splits = def_splits

    xf = x.reshape(-1)
    yf = y.reshape(-1)

    rows_main = n_valid // _LANES
    n_main = rows_main * _LANES
    tail = n_valid - n_main

    # Ragged tail (<128 elements): tiny plain-jnp sum in the wrapper, no padding.
    if tail:
        xt = xf[n_main:].astype(jnp.float32)
        yt = yf[n_main:].astype(jnp.float32)
        dt = xt - yt
        tail_sum = jnp.sum(jnp.sqrt(dt * dt + jnp.float32(eps2)))
    else:
        tail_sum = jnp.float32(0.0)

    if rows_main == 0:
        return tail_sum / jnp.float32(n_valid)

    # Lane-aligned prefix: free reshape when aligned; a prefix slice otherwise
    # (cheaper than padding both inputs into fresh, larger buffers).
    xm = xf if not tail else xf[:n_main]
    ym = yf if not tail else yf[:n_main]
    x2 = xm.reshape(rows_main, _LANES)
    y2 = ym.reshape(rows_main, _LANES)

    # Block size: dtype-aware sublane multiple, clamped for small inputs.
    mult = _sublane_multiple(x.dtype, y.dtype)
    block_rows = _round_up(max(int(block_rows), mult), mult)
    block_rows = min(block_rows, _round_up(rows_main, mult))

    nblocks = pl.cdiv(rows_main, block_rows)

    # v7x dual-TensorCore split, only when the block count divides evenly.
    nsplits = int(num_core_splits)
    if nsplits < 1 or nblocks % nsplits != 0:
        nsplits = 1
    nblocks_per_split = nblocks // nsplits

    # Row overhang of the globally-last block; None => no mask emitted at all.
    rows_rem = rows_main - (nblocks - 1) * block_rows
    if rows_rem == block_rows:
        rows_rem = None

    kernel = functools.partial(
        _charbonnier_kernel,
        eps2=eps2,
        rows_rem=rows_rem,
        nsplits=nsplits,
        nblocks_per_split=nblocks_per_split,
    )

    def in_map(c, i):
        return (c * nblocks_per_split + i, 0)

    partials = pl.pallas_call(
        kernel,
        out_shape=jax.ShapeDtypeStruct((nsplits, 1), jnp.float32),
        grid_spec=pltpu.PrefetchScalarGridSpec(
            num_scalar_prefetch=0,
            grid=(nsplits, nblocks_per_split),
            in_specs=[
                pl.BlockSpec((block_rows, _LANES), in_map),
                pl.BlockSpec((block_rows, _LANES), in_map),
            ],
            out_specs=pl.BlockSpec(
                (1, 1), lambda c, i: (c, 0),
                memory_space=pltpu.MemorySpace.SMEM,
            ),
            scratch_shapes=[pltpu.VMEM((_SUBLANES, _LANES), jnp.float32)],
        ),
        compiler_params=pltpu.CompilerParams(
            dimension_semantics=("parallel", "arbitrary"),
            vmem_limit_bytes=vmem_limit_bytes,
        ),
    )(x2, y2)

    return (jnp.sum(partials) + tail_sum) / jnp.float32(n_valid)


def charbonnier_loss_ref(x, y, eps=1e-3):
    diff = x.astype(jnp.float32) - y.astype(jnp.float32)
    return jnp.mean(jnp.sqrt(diff * diff + eps * eps))


if __name__ == "__main__":
    key = jax.random.PRNGKey(0)
    kx, ky, kx2, ky2 = jax.random.split(key, 4)

    # NCHW inputs, same convention as the PyTorch module.
    x = jax.random.normal(kx, (2, 4, 16, 16), dtype=jnp.float32)
    y = jax.random.normal(ky, (2, 4, 16, 16), dtype=jnp.float32)
    loss = charbonnier_loss(x, y, eps=1e-3)
    jax.block_until_ready(loss)
    ref = charbonnier_loss_ref(x, y, eps=1e-3)
    assert jnp.allclose(loss, ref, rtol=1e-5, atol=1e-6), (loss, ref)

    # Non-lane-aligned shape: exercises the ragged-tail path + last-block row mask.
    x2 = jax.random.normal(kx2, (2, 3, 11, 11), dtype=jnp.float32)
    y2 = jax.random.normal(ky2, (2, 3, 11, 11), dtype=jnp.float32)
    loss2 = charbonnier_loss(x2, y2, eps=1e-3)
    jax.block_until_ready(loss2)
    ref2 = charbonnier_loss_ref(x2, y2, eps=1e-3)
    assert jnp.allclose(loss2, ref2, rtol=1e-5, atol=1e-6), (loss2, ref2)

    # bf16 inputs: native-dtype loads, f32 accumulation in-kernel.
    xb = x.astype(jnp.bfloat16)
    yb = y.astype(jnp.bfloat16)
    loss3 = charbonnier_loss(xb, yb, eps=1e-3)
    jax.block_until_ready(loss3)
    ref3 = charbonnier_loss_ref(xb, yb, eps=1e-3)
    assert jnp.allclose(loss3, ref3, rtol=1e-5, atol=1e-6), (loss3, ref3)

    print("KERNEL_OK")
</pallas_src>

<mosaic_0001>
module attributes {stable_mosaic.version = 11 : i64} {
  func.func @_charbonnier_kernel(%arg0: i32, %arg1: i32, %arg2: memref<16x128xf32, #tpu.memory_space<vmem>>, %arg3: memref<16x128xf32, #tpu.memory_space<vmem>>, %arg4: memref<1x1xf32, #tpu.memory_space<smem>>, %arg5: memref<8x128xf32, #tpu.memory_space<vmem>>) attributes {dimension_semantics = [#tpu.dimension_semantics<parallel>, #tpu.dimension_semantics<arbitrary>], iteration_bounds = array<i64: 1, 1>, scalar_prefetch = 0 : i64, scratch_operands = 1 : i64, tpu.core_type = #tpu.core_type<tc>, window_params = [{transform_indices = @transform_0, window_bounds = array<i64: 16, 128>}, {transform_indices = @transform_1, window_bounds = array<i64: 16, 128>}, {transform_indices = @transform_2, window_bounds = array<i64: 1, 1>}]} {
    %c0_i32 = arith.constant 0 : i32
    %0 = arith.cmpi eq, %arg1, %c0_i32 : i32
    %1 = arith.extui %0 : i1 to i32
    %c0_i32_0 = arith.constant 0 : i32
    %2 = arith.cmpi ne, %1, %c0_i32_0 : i32
    scf.if %2 {
      %cst_11 = arith.constant 0.000000e+00 : f32
      %18 = vector.broadcast %cst_11 : f32 to vector<8x128xf32>
      %c0_12 = arith.constant 0 : index
      %c0_13 = arith.constant 0 : index
      %19 = vector.load %arg5[%c0_12, %c0_13] : memref<8x128xf32, #tpu.memory_space<vmem>>, vector<8x128xf32>
      tpu.vector_store %arg5[%c0_12, %c0_13], %18 {strides = array<i32>} : memref<8x128xf32, #tpu.memory_space<vmem>>, vector<8x128xf32>,
    } else {
    }
    %c0 = arith.constant 0 : index
    %c0_1 = arith.constant 0 : index
    %3 = vector.load %arg2[%c0, %c0_1] : memref<16x128xf32, #tpu.memory_space<vmem>>, vector<16x128xf32>
    %c0_2 = arith.constant 0 : index
    %c0_3 = arith.constant 0 : index
    %4 = vector.load %arg3[%c0_2, %c0_3] : memref<16x128xf32, #tpu.memory_space<vmem>>, vector<16x128xf32>
    %5 = arith.subf %3, %4 : vector<16x128xf32>
    %6 = arith.mulf %5, %5 : vector<16x128xf32>
    %cst = arith.constant 9.99999997E-7 : f32
    %7 = vector.broadcast %cst : f32 to vector<16x128xf32>
    %8 = arith.addf %6, %7 : vector<16x128xf32>
    %9 = math.sqrt %8 : vector<16x128xf32>
    %c0_4 = arith.constant 0 : index
    %c0_5 = arith.constant 0 : index
    %10 = vector.load %arg5[%c0_4, %c0_5] : memref<8x128xf32, #tpu.memory_space<vmem>>, vector<8x128xf32>
    %11 = vector.shape_cast %9 : vector<16x128xf32> to vector<2x8x128xf32>
    %cst_6 = arith.constant dense<0.000000e+00> : vector<8x128xf32>
    %12 = vector.multi_reduction <add>, %11, %cst_6 [0] : vector<2x8x128xf32> to vector<8x128xf32>
    %13 = arith.addf %10, %12 : vector<8x128xf32>
    %c0_7 = arith.constant 0 : index
    %c0_8 = arith.constant 0 : index
    %14 = vector.load %arg5[%c0_7, %c0_8] : memref<8x128xf32, #tpu.memory_space<vmem>>, vector<8x128xf32>
    tpu.vector_store %arg5[%c0_7, %c0_8], %13 {strides = array<i32>} : memref<8x128xf32, #tpu.memory_space<vmem>>, vector<8x128xf32>,
    %c0_i32_9 = arith.constant 0 : i32
    %15 = arith.cmpi eq, %arg1, %c0_i32_9 : i32
    %16 = arith.extui %15 : i1 to i32
    %c0_i32_10 = arith.constant 0 : i32
    %17 = arith.cmpi ne, %16, %c0_i32_10 : i32
    scf.if %17 {
      %c0_11 = arith.constant 0 : index
      %c0_12 = arith.constant 0 : index
      %18 = vector.load %arg5[%c0_11, %c0_12] : memref<8x128xf32, #tpu.memory_space<vmem>>, vector<8x128xf32>
      %19 = vector.shape_cast %18 : vector<8x128xf32> to vector<1x8x128xf32>
      %cst_13 = arith.constant dense<0.000000e+00> : vector<1xf32>
      %20 = vector.multi_reduction <add>, %19, %cst_13 [1, 2] : vector<1x8x128xf32> to vector<1xf32>
      %21 = vector.shape_cast %20 : vector<1xf32> to vector<1x1x1xf32>
      %22 = vector.extract %21[0, 0, 0] : f32 from vector<1x1x1xf32>
      %c0_14 = arith.constant 0 : index
      %c0_15 = arith.constant 0 : index
      %23 = memref.load %arg4[%c0_14, %c0_15] : memref<1x1xf32, #tpu.memory_space<smem>>
      memref.store %22, %arg4[%c0_14, %c0_15] : memref<1x1xf32, #tpu.memory_space<smem>>
    } else {
    }
    return
  }
  func.func @transform_0(%arg0: i32, %arg1: i32) -> (i32, i32) {
    %c1_i32 = arith.constant 1 : i32
    %0 = arith.muli %arg0, %c1_i32 : i32
    %1 = arith.addi %0, %arg1 : i32
    %c0_i32 = arith.constant 0 : i32
    %c0_i32_0 = arith.constant 0 : i32
    return %1, %c0_i32 : i32, i32
  }
  func.func @transform_1(%arg0: i32, %arg1: i32) -> (i32, i32) {
    %c1_i32 = arith.constant 1 : i32
    %0 = arith.muli %arg0, %c1_i32 : i32
    %1 = arith.addi %0, %arg1 : i32
    %c0_i32 = arith.constant 0 : i32
    %c0_i32_0 = arith.constant 0 : i32
    return %1, %c0_i32 : i32, i32
  }
  func.func @transform_2(%arg0: i32, %arg1: i32) -> (i32, i32) {
    %c0_i32 = arith.constant 0 : i32
    %c0_i32_0 = arith.constant 0 : i32
    return %arg0, %c0_i32 : i32, i32
  }
}

</mosaic_0001>

<llo_original>
// kernel: tpu_custom_call.1
$region0: #{tpu_custom_call.1}
  #allocation0 [shape = 'u32[]', space=smem, size = 0x4, offset = 0x4, fixed_abs, tag = 'smem constant byte address 0x4 - core index']
  #allocation1 [shape = 'u32[72,128]{1,0:T(1,128)}', space=vmem, size = 0x9000, scoped, tag = 'internal scratch']
  #allocation2 [shape = 'f32[8,128]{1,0:T(8,128)}', space=vmem, size = 0x1000, scoped, tag = 'scratch operand']
  %s0 = inlined_call_operand.hbm [shape: f32[16,128], index: 0, kind: input, shape index: {}]
  %s1 = inlined_call_operand.hbm [shape: f32[16,128], index: 1, kind: input, shape index: {}]
  %s2 = inlined_call_operand.hbm [shape: f32[1,1], index: 2, kind: output, shape index: {}]
  %s3 = sld [smem:[#allocation0]]
  $region34: #{tpu_custom_call.1} parent=0
    _
  %s5 = ssub.s32 1, %s3
  %s6 = scalar_select 0, %s5, %s3
  $region1: #{tpu_custom_call.1} parent=0
    #allocation3 [shape = 'u8[8192]{0}', space=vmem, size = 0x2000, scoped, tag = 'input window, operand 0, single buffered']
    #allocation4 [shape = 's32[1]{0}', space=sflag, size = 0x4, scoped, tag = 'scoped memory for tpu_custom_call.1']
    #allocation5 [shape = 's32[1]{0}', space=sflag, size = 0x4, scoped, tag = 'scoped memory for tpu_custom_call.1']
    #allocation6 [shape = 'u8[8192]{0}', space=vmem, size = 0x2000, scoped, tag = 'input window, operand 1, single buffered']
    #allocation7 [shape = 's32[1]{0}', space=sflag, size = 0x4, scoped, tag = 'scoped memory for tpu_custom_call.1']
    #allocation8 [shape = 'u8[512]{0}', space=smem, size = 0x200, scoped, tag = 'output window, operand 0, single buffered']
    %7 = vsyncpa [#allocation4], 0
    %8 = vsyncpa [#allocation7], 0
    %9 = vsyncpa [#allocation5], 0
    // Predicated region
    $region2: #{tpu_custom_call.1} parent=1 // pred_check
      _
    $region3: #{tpu_custom_call.1} parent=1 // pred_check_branch
      %11 = sbr.rel (0) target = $region5
    $region4: #{tpu_custom_call.1} parent=1 // pred_region
      %s12 = sadd.s32 0, 0
      %s13 = smul.u32 2, %s12
      %15 = vsyncadd [#allocation4], 0
      %s16 = smul.addr %s13, 8
      %s17 = scalar_lea.hbm %s0, %s16
      %s18 = sshll.u32 %s17, 4
      %s19 = int_to_ptr.hbm [resolvable:$true] %s18
      %s20 = sshll.u32 [#allocation3], 4
      %s21 = int_to_ptr.vmem [resolvable:$true] %s20
      %26 = dma.hbm_to_vmem [thread:$0]  %s19, 256, %s21, [#allocation4], 128, 128, 8
    $region5: #{tpu_custom_call.1} parent=1 // pred_fallthru
      _
    // Predicated region
    $region6: #{tpu_custom_call.1} parent=1 // pred_check
      _
    $region7: #{tpu_custom_call.1} parent=1 // pred_check_branch
      %28 = sbr.rel (0) target = $region9
    $region8: #{tpu_custom_call.1} parent=1 // pred_region
      %s29 = sadd.s32 0, 0
      %s30 = smul.u32 2, %s29
      %32 = vsyncadd [#allocation7], 0
      %s33 = smul.addr %s30, 8
      %s34 = scalar_lea.hbm %s1, %s33
      %s35 = sshll.u32 %s34, 4
      %s36 = int_to_ptr.hbm [resolvable:$true] %s35
      %s37 = sshll.u32 [#allocation6], 4
      %s38 = int_to_ptr.vmem [resolvable:$true] %s37
      %43 = dma.hbm_to_vmem [thread:$0]  %s36, 256, %s38, [#allocation7], 128, 128, 8
    $region9: #{tpu_custom_call.1} parent=1 // pred_fallthru
      _
    // Predicated region
    $region10: #{tpu_custom_call.1} parent=1 // pred_check
      _
    $region11: #{tpu_custom_call.1} parent=1 // pred_check_branch
      %45 = sbr.rel (0) target = $region13
    $region12: #{tpu_custom_call.1} parent=1 // pred_region
      %47 = dma.done [#allocation4], 256
    $region13: #{tpu_custom_call.1} parent=1 // pred_fallthru
      _
    // Predicated region
    $region14: #{tpu_custom_call.1} parent=1 // pred_check
      _
    $region15: #{tpu_custom_call.1} parent=1 // pred_check_branch
      %49 = sbr.rel (0) target = $region17
    $region16: #{tpu_custom_call.1} parent=1 // pred_region
      %51 = dma.done [#allocation7], 256
    $region17: #{tpu_custom_call.1} parent=1 // pred_fallthru
      _
    %s52 = sadd.s32 0, 0
    %s53 = smul.u32 2, %s52
    %s54 = sadd.s32 0, 0
    %s55 = smul.u32 2, %s54
    %p56 = scmp.eq.s32.totalorder 0, 0
    // Predicated region
    $region18: #{tpu_custom_call.1} parent=1 // pred_check
      %p57 = pneg %p56
    $region19: #{tpu_custom_call.1} parent=1 // pred_check_branch
      %59 = sbr.rel (%p57) target = $region21
    $region20: #{tpu_custom_call.1} parent=1 // pred_region
      %60 = vst [vmem:[#allocation2] sm:$0xff] 0.0
    $region21: #{tpu_custom_call.1} parent=1 // pred_fallthru
      _
    %v61 = vld [vmem:[#allocation3] sm:$0xff]
    %v62 = vld [vmem:[#allocation3 + $0x8] sm:$0xff]
    %v63 = vld [vmem:[#allocation6] sm:$0xff]
    %v64 = vld [vmem:[#allocation6 + $0x8] sm:$0xff]
    %v65 = vsub.f32 %v61, %v63
    %v66 = vsub.f32 %v62, %v64
    %v67 = vmul.f32 %v65, %v65
    %v68 = vmul.f32 %v66, %v66
    %v69 = vadd.f32 %v67, 1e-06
    %v70 = vadd.f32 %v68, 1e-06
    %v71 = vrsqrt.pop %v69
    %v72 = vmul.f32 %v71, %v69
    %v73 = vmul.f32 %v72, %v71
    %v74 = vmul.f32 0.5, %v73
    %v75 = vsub.f32 1.5, %v74
    %v76 = vmul.f32 %v71, %v75
    %v77 = vmul.f32 %v69, %v76
    %vm78 = vcmp.eq.f32.partialorder %v69, inf
    %v79 = vsel %vm78, %v69, %v77
    %vm80 = vcmp.eq.f32.partialorder %v69, 0.0
    %v81 = vand.u32 %v69, 2147483648
    %v82 = vsel %vm80, %v81, %v79
    %v83 = vrsqrt.pop %v70
    %v84 = vmul.f32 %v83, %v70
    %v85 = vmul.f32 %v84, %v83
    %v86 = vmul.f32 0.5, %v85
    %v87 = vsub.f32 1.5, %v86
    %v88 = vmul.f32 %v83, %v87
    %v89 = vmul.f32 %v70, %v88
    %vm90 = vcmp.eq.f32.partialorder %v70, inf
    %v91 = vsel %vm90, %v70, %v89
    %vm92 = vcmp.eq.f32.partialorder %v70, 0.0
    %v93 = vand.u32 %v70, 2147483648
    %v94 = vsel %vm92, %v93, %v91
    %v95 = vld [vmem:[#allocation2] sm:$0xff]
    %v96 = vadd.f32 %v82, %v94
    %v97 = vadd.f32 %v95, %v96
    %98 = vst [vmem:[#allocation2] sm:$0xff] %v97
    // Predicated region
    $region22: #{tpu_custom_call.1} parent=1 // pred_check
      %p99 = pneg %p56
    $region23: #{tpu_custom_call.1} parent=1 // pred_check_branch
      %101 = sbr.rel (%p99) target = $region25
    $region24: #{tpu_custom_call.1} parent=1 // pred_region
      %v102 = vld [vmem:[#allocation2] sm:$0xff]
      %103 = vadd.xlane.f32.xlu0 %v102
      %v104 = vpop.xlane.xlu0 %103
      %v105 = vrot.slane %v104, 4
      %v106 = vadd.f32 %v104, %v105
      %v107 = vrot.slane %v106, 2
      %v108 = vadd.f32 %v106, %v107
      %v109 = vrot.slane %v108, 1
      %v110 = vadd.f32 %v108, %v109
      %s111 = vtos %v110
      %s112 = scalar_lea.smem [#allocation8], 0
      %113 = sst [smem:[%s112]] %s111
    $region25: #{tpu_custom_call.1} parent=1 // pred_fallthru
      _
    // Predicated region
    $region26: #{tpu_custom_call.1} parent=1 // pred_check
      _
    $region27: #{tpu_custom_call.1} parent=1 // pred_check_branch
      %115 = sbr.rel (0) target = $region29
    $region28: #{tpu_custom_call.1} parent=1 // pred_region
      %117 = vsyncadd [#allocation5], 0
      %s119 = sshll.u32 %s2, 4
      %s120 = int_to_ptr.hbm [resolvable:$true] %s119
      %122 = dma.smem_to_hbm [#allocation8], 16, %s120, [#allocation5]
    $region29: #{tpu_custom_call.1} parent=1 // pred_fallthru
      _
    // Predicated region
    $region30: #{tpu_custom_call.1} parent=1 // pred_check
      _
    $region31: #{tpu_custom_call.1} parent=1 // pred_check_branch
      %124 = sbr.rel (0) target = $region33
    $region32: #{tpu_custom_call.1} parent=1 // pred_region
      %126 = dma.done [#allocation5], 16
    $region33: #{tpu_custom_call.1} parent=1 // pred_fallthru
      _
    %127 = sfence
    %128 = vsyncpa [#allocation4], 1
    %129 = vsyncpa [#allocation7], 1
    %130 = vsyncpa [#allocation5], 1

</llo_original>
